<compile_context>
chip_gen: v7x
topology: tpu7x:2x2x1
jax: 0.10.0
libtpu: 0.0.40
codegen_flags: <defaults>
</compile_context>

<pallas_src>
from functools import partial

import jax
import jax.numpy as jnp
from jax.experimental import pallas as pl
from jax.experimental.pallas import tpu as pltpu


def _identity_copy_kernel(x_ref, o_ref):
    # Straight VMEM tile copy (identity).
    o_ref[...] = x_ref[...]


_SINGLE_BLOCK_MAX_BYTES = 4 * 1024 * 1024   # whole-array-in-VMEM fast path
_TILE_TARGET_BYTES = 2 * 1024 * 1024        # per-tile bytes for the tiled path


@partial(jax.jit, donate_argnums=(0,))
def _forward_jit(x):
    orig_shape = x.shape
    total = int(x.size)
    if total == 0:
        return x

    itemsize = jnp.dtype(x.dtype).itemsize

    # Lane-dense 2D factorization of the flat element count (metadata-only reshape;
    # no HBM traffic, no padding, no masked partial stores).
    cols = next((c for c in (4096, 2048, 1024, 512, 256, 128) if total % c == 0), 0)
    if cols == 0:
        # No factor of 128: keep the natural trailing dim.  A block whose lane dim
        # equals the full array extent is exempt from the 128 divisibility rule.
        cols = orig_shape[-1] if len(orig_shape) else 1
        cols = max(int(cols), 1)
    rows = total // cols
    total_bytes = rows * cols * itemsize

    if (total_bytes > _SINGLE_BLOCK_MAX_BYTES and cols % 128 != 0
            and cols * 8 * itemsize > _TILE_TARGET_BYTES):
        # TODO(synk): huge array whose flat size has no factor of 128 — the module is a
        # pure identity, so short-circuiting is exact and cheaper than any copy kernel.
        return x

    x2 = x.reshape(rows, cols)

    if total_bytes <= _SINGLE_BLOCK_MAX_BYTES:
        # Single full-array block: one DMA in, one DMA out, zero grid bookkeeping.
        out2 = pl.pallas_call(
            _identity_copy_kernel,
            out_shape=jax.ShapeDtypeStruct((rows, cols), x2.dtype),
            input_output_aliases={0: 0},
        )(x2)
    else:
        # Row-tiled copy.  tr is a multiple of 8 sized so one (tr, cols) tile is
        # ~2 MiB -> ~8 MiB double-buffered in+out, inside every generation's
        # default scoped VMEM limit.
        tr = min(1024, max(8, (_TILE_TARGET_BYTES // (cols * itemsize)) // 8 * 8))
        out2 = pl.pallas_call(
            _identity_copy_kernel,
            out_shape=jax.ShapeDtypeStruct((rows, cols), x2.dtype),
            grid_spec=pltpu.PrefetchScalarGridSpec(
                num_scalar_prefetch=0,
                grid=(pl.cdiv(rows, tr),),
                in_specs=[pl.BlockSpec((tr, cols), lambda i: (i, 0))],
                out_specs=pl.BlockSpec((tr, cols), lambda i: (i, 0)),
            ),
            input_output_aliases={0: 0},
            compiler_params=pltpu.CompilerParams(
                dimension_semantics=("parallel",),
                vmem_limit_bytes=32 * 1024 * 1024,
            ),
        )(x2)

    return out2.reshape(orig_shape)


def net_forward(x):
    """Pallas implementation of Net.forward(x) == x.

    NOTE: mirroring PyTorch's `return x` (which returns the same tensor storage),
    the input buffer is donated and the result aliases it; do not reuse `x` after
    this call — use the returned array instead.
    """
    return _forward_jit(x)


if __name__ == "__main__":
    key = jax.random.PRNGKey(0)
    # Small NCHW-style input consistent with a conv-style module: batch=2, channels=4, 16x16.
    x = jax.random.normal(key, (2, 4, 16, 16), dtype=jnp.float32)
    x_expected = jnp.copy(x)  # independent copy: x itself is donated/aliased below

    y = net_forward(x)
    jax.block_until_ready(y)

    assert y.shape == x_expected.shape, (y.shape, x_expected.shape)
    assert y.dtype == x_expected.dtype, (y.dtype, x_expected.dtype)
    assert bool(jnp.array_equal(y, x_expected)), "identity mismatch"

    print("KERNEL_OK")
</pallas_src>

<mosaic_0001>
module attributes {stable_mosaic.version = 11 : i64} {
  func.func @_identity_copy_kernel(%arg0: memref<1x2048xf32, #tpu.memory_space<vmem>>, %arg1: memref<1x2048xf32, #tpu.memory_space<vmem>>) attributes {dimension_semantics = [], scalar_prefetch = 0 : i64, scratch_operands = 0 : i64, tpu.core_type = #tpu.core_type<tc>} {
    %c0 = arith.constant 0 : index
    %c0_0 = arith.constant 0 : index
    %0 = vector.load %arg0[%c0, %c0_0] : memref<1x2048xf32, #tpu.memory_space<vmem>>, vector<1x2048xf32>
    %c0_1 = arith.constant 0 : index
    %c0_2 = arith.constant 0 : index
    %1 = vector.load %arg1[%c0_1, %c0_2] : memref<1x2048xf32, #tpu.memory_space<vmem>>, vector<1x2048xf32>
    tpu.vector_store %arg1[%c0_1, %c0_2], %0 {strides = array<i32>} : memref<1x2048xf32, #tpu.memory_space<vmem>>, vector<1x2048xf32>,
    return
  }
}

</mosaic_0001>

<llo_original>
// kernel: _forward_jit.1
$region0: #{_forward_jit.1}
  #allocation0 [shape = 'u32[]', space=smem, size = 0x4, offset = 0x4, fixed_abs, tag = 'smem constant byte address 0x4 - core index']
  #allocation1 [shape = 'u32[144,128]{1,0:T(1,128)}', space=vmem, size = 0x12000, scoped, tag = 'internal scratch']
  %s0 = inlined_call_operand.vmem [shape: f32[1,2048], index: 0, kind: input, shape index: {}, may-alias: {0,1}]
  %s1 = inlined_call_operand.vmem [shape: f32[1,2048], index: 1, kind: output, shape index: {}, may-alias: {0,1}]
  %s2 = sld [smem:[#allocation0]]
  $region14: #{_forward_jit.1} parent=0
    _
  %s4 = ssub.s32 1, %s2
  %s5 = scalar_select 0, %s4, %s2
  // Predicated region
  $region2: #{_forward_jit.1} parent=0 // pred_check
    _
  $region3: #{_forward_jit.1} parent=0 // pred_check_branch
    %7 = sbr.rel (0) target = $region5
  $region4: #{_forward_jit.1} parent=0 // pred_region
    _
  $region5: #{_forward_jit.1} parent=0 // pred_fallthru
    _
  %v8 = vld [vmem:[%s0] sm:$0xff]
  %v9 = vld [vmem:[%s0 + $0x8] sm:$0xff]
  %10 = vst [vmem:[%s1] sm:$0xff] %v8
  %11 = vst [vmem:[%s1 + $0x8] sm:$0xff] %v9
  // Predicated region
  $region6: #{_forward_jit.1} parent=0 // pred_check
    _
  $region7: #{_forward_jit.1} parent=0 // pred_check_branch
    %13 = sbr.rel (0) target = $region9
  $region8: #{_forward_jit.1} parent=0 // pred_region
    _
  $region9: #{_forward_jit.1} parent=0 // pred_fallthru
    _
  // Predicated region
  $region10: #{_forward_jit.1} parent=0 // pred_check
    _
  $region11: #{_forward_jit.1} parent=0 // pred_check_branch
    %15 = sbr.rel (0) target = $region13
  $region12: #{_forward_jit.1} parent=0 // pred_region
    _
  $region13: #{_forward_jit.1} parent=0 // pred_fallthru
    _

</llo_original>
